<compile_context>
chip_gen: v6e
topology: v6e:2x2x1
jax: 0.10.0
libtpu: 0.0.40
codegen_flags: <defaults>
</compile_context>

<pallas_src>
import functools

import jax
import jax.numpy as jnp
from jax.experimental import pallas as pl
from jax.experimental.pallas import tpu as pltpu


def _ldam_loss_kernel(target_ref, x_ref, m_ref, out_ref, *, s, batch, tile_b):
    # target_ref: (TB, 1) int32  VMEM
    # x_ref:      (TB, C) native dtype VMEM
    # m_ref:      (1, C)  f32    VMEM (resident: constant block index)
    # out_ref:    (1, 8, 128) f32 VMEM (this tile's partial sum, broadcast)
    i = pl.program_id(0)

    x = x_ref[...].astype(jnp.float32)        # upcast in-kernel (free VPU op)
    m = m_ref[...]                            # (1, C)
    tgt = target_ref[...]                     # (TB, 1)
    TB, C = x.shape

    # Valid-row mask for the tail tile (B not a multiple of TB).
    row = jax.lax.broadcasted_iota(jnp.int32, (TB, 1), 0)
    valid = (i * tile_b + row) < batch        # (TB, 1) bool

    # one-hot "index" (scatter_ in the torch code)
    col = jax.lax.broadcasted_iota(jnp.int32, (TB, C), 1)
    onehot = col == tgt                       # (TB, C) bool

    # Fused gathers: per-sample margin and per-sample target logit.
    batch_m = jnp.sum(jnp.where(onehot, m, 0.0), axis=1, keepdims=True)   # (TB,1)
    x_t = jnp.sum(jnp.where(onehot, x, 0.0), axis=1, keepdims=True)       # (TB,1)

    # output = where(index, x - batch_m, x); scale by s
    z = jnp.float32(s) * jnp.where(onehot, x - batch_m, x)                # (TB,C)

    # cross_entropy(z, target): max-stabilized log-sum-exp minus target logit.
    z_max = jnp.max(z, axis=1, keepdims=True)
    lse = jnp.log(jnp.sum(jnp.exp(z - z_max), axis=1, keepdims=True)) + z_max
    z_t = jnp.float32(s) * (x_t - batch_m)    # analytic target logit (exact)
    per_sample = lse - z_t                    # (TB, 1)

    per_sample = jnp.where(valid, per_sample, 0.0)
    partial = jnp.sum(per_sample)
    out_ref[...] = jnp.full(out_ref.shape, partial, dtype=jnp.float32)


def _choose_tile_b(B, C, itemsize):
    """Largest batch tile (multiple of 8, <=512) whose double-buffered x tiles
    stay well under the scoped-VMEM default on every TPU generation."""
    tb = 512
    while tb > 8 and 2 * tb * C * itemsize > 8 * 2**20:
        tb //= 2
    if B <= tb:
        return B                               # block == full dim -> always legal
    return tb


def ldam_loss(x, target, m_list, *, s=30.0, weight=None, tile_b=None):
    """Pallas LDAM loss. x: (B, C) float/bf16, target: (B,) int, m_list: (C,) f32."""
    # TODO(synk): per-class `weight` for the cross-entropy is not implemented
    # (the module's default is weight=None, which is what we reproduce).
    assert weight is None
    B, C = x.shape
    itemsize = jnp.dtype(x.dtype).itemsize

    if tile_b is None:
        TB = _choose_tile_b(B, C, itemsize)
    else:
        TB = B if tile_b >= B else int(tile_b)
        if TB < B:
            assert TB % 8 == 0, "tile_b must be a multiple of 8 when tiling"
    num_tiles = pl.cdiv(B, TB)

    target2d = target.reshape(B, 1).astype(jnp.int32)
    m2d = m_list.reshape(1, C).astype(jnp.float32)

    kernel = functools.partial(_ldam_loss_kernel, s=float(s), batch=B, tile_b=TB)

    # Scoped-VMEM budget: double-buffered x + target blocks, resident m,
    # per-tile output block, plus generous headroom; capped at v7x physical.
    block_bytes = TB * C * itemsize + TB * 4 + C * 4 + 8 * 128 * 4
    vmem_limit = int(min(64 * 2**20, max(16 * 2**20, 4 * block_bytes)))

    partials = pl.pallas_call(
        kernel,
        out_shape=jax.ShapeDtypeStruct((num_tiles, 8, 128), jnp.float32),
        grid=(num_tiles,),
        in_specs=[
            pl.BlockSpec((TB, 1), lambda i: (i, 0)),     # target, tiled over batch
            pl.BlockSpec((TB, C), lambda i: (i, 0)),     # x, tiled over batch
            pl.BlockSpec((1, C), lambda i: (0, 0)),      # m_list, resident
        ],
        out_specs=pl.BlockSpec((1, 8, 128), lambda i: (i, 0, 0)),
        compiler_params=pltpu.CompilerParams(
            dimension_semantics=("parallel",),           # shard tiles across TCs (v7x)
            vmem_limit_bytes=vmem_limit,
        ),
    )(target2d, x, m2d)

    # Tiny cross-tile reduction; divide by the *global* batch size.
    return jnp.sum(partials[:, 0, 0]) / jnp.float32(B)


def _reference_ldam_loss(x, target, m_list, s=30.0):
    x = x.astype(jnp.float32)
    B, C = x.shape
    onehot = jax.nn.one_hot(target, C, dtype=jnp.float32)
    batch_m = (onehot * m_list[None, :]).sum(axis=1, keepdims=True)
    out = jnp.where(onehot > 0, x - batch_m, x)
    z = s * out
    logp = jax.nn.log_softmax(z, axis=1)
    return -jnp.mean(jnp.sum(onehot * logp, axis=1))


if __name__ == "__main__":
    # Synthetic deterministic setup: LDAM-style margins from fake class counts,
    # as utils.get_mlist() would produce.
    max_m = 0.5
    s = 30.0
    key = jax.random.PRNGKey(0)

    # --- Demo 1: small single-tile case (B=8, C=16), f32 logits ------------
    num_classes = 16
    batch = 8
    cls_num_list = jnp.array(
        [100, 90, 80, 70, 60, 50, 40, 30, 25, 20, 15, 12, 10, 8, 6, 4],
        dtype=jnp.float32,
    )
    m_list = 1.0 / jnp.sqrt(jnp.sqrt(cls_num_list))
    m_list = m_list * (max_m / jnp.max(m_list))       # (C,) margins

    k1, k2, k3, k4 = jax.random.split(key, 4)
    x = jax.random.normal(k1, (batch, num_classes), dtype=jnp.float32)
    target = jax.random.randint(k2, (batch,), 0, num_classes, dtype=jnp.int32)

    loss = jax.block_until_ready(ldam_loss(x, target, m_list, s=s))
    ref = _reference_ldam_loss(x, target, m_list, s=s)
    assert jnp.allclose(loss, ref, rtol=1e-5, atol=1e-5), (loss, ref)

    # --- Demo 2: multi-tile path with tail masking, lane-dense C=128, bf16 --
    num_classes2 = 128
    batch2 = 40                                     # tiles of 16, 16, 8 (masked tail)
    cls_counts2 = jnp.linspace(200.0, 5.0, num_classes2)
    m_list2 = 1.0 / jnp.sqrt(jnp.sqrt(cls_counts2))
    m_list2 = m_list2 * (max_m / jnp.max(m_list2))

    x2 = jax.random.normal(k3, (batch2, num_classes2), dtype=jnp.float32)
    x2_bf16 = x2.astype(jnp.bfloat16)               # native-dtype DMA, upcast in-kernel
    target2 = jax.random.randint(k4, (batch2,), 0, num_classes2, dtype=jnp.int32)

    loss2 = jax.block_until_ready(ldam_loss(x2_bf16, target2, m_list2, s=s, tile_b=16))
    ref2 = _reference_ldam_loss(x2_bf16, target2, m_list2, s=s)
    assert jnp.allclose(loss2, ref2, rtol=1e-4, atol=1e-4), (loss2, ref2)

    print("KERNEL_OK")
</pallas_src>

<mosaic_0001>
module attributes {stable_mosaic.version = 11 : i64} {
  func.func @_ldam_loss_kernel(%arg0: i32, %arg1: memref<8x1xi32, #tpu.memory_space<vmem>>, %arg2: memref<8x16xf32, #tpu.memory_space<vmem>>, %arg3: memref<1x16xf32, #tpu.memory_space<vmem>>, %arg4: memref<1x8x128xf32, #tpu.memory_space<vmem>>) attributes {dimension_semantics = [#tpu.dimension_semantics<parallel>], iteration_bounds = array<i64: 1>, scalar_prefetch = 0 : i64, scratch_operands = 0 : i64, tpu.core_type = #tpu.core_type<tc>, window_params = [{transform_indices = @transform_0, window_bounds = array<i64: 8, 1>}, {transform_indices = @transform_1, window_bounds = array<i64: 8, 16>}, {pipeline_mode = #tpu.pipeline_mode<synchronous>, transform_indices = @transform_2, window_bounds = array<i64: 1, 16>}, {transform_indices = @transform_3, window_bounds = array<i64: 1, 8, 128>}]} {
    %c0 = arith.constant 0 : index
    %c0_0 = arith.constant 0 : index
    %0 = vector.load %arg2[%c0, %c0_0] : memref<8x16xf32, #tpu.memory_space<vmem>>, vector<8x16xf32>
    %c0_1 = arith.constant 0 : index
    %c0_2 = arith.constant 0 : index
    %1 = vector.load %arg3[%c0_1, %c0_2] : memref<1x16xf32, #tpu.memory_space<vmem>>, vector<1x16xf32>
    %c0_3 = arith.constant 0 : index
    %c0_4 = arith.constant 0 : index
    %2 = vector.load %arg1[%c0_3, %c0_4] : memref<8x1xi32, #tpu.memory_space<vmem>>, vector<8x1xi32>
    %3 = tpu.iota {dimensions = array<i32: 0>} : vector<8x1xi32>
    %c8_i32 = arith.constant 8 : i32
    %4 = arith.muli %arg0, %c8_i32 : i32
    %5 = vector.broadcast %4 : i32 to vector<8x1xi32>
    %6 = arith.addi %5, %3 : vector<8x1xi32>
    %c8_i32_5 = arith.constant 8 : i32
    %7 = vector.broadcast %c8_i32_5 : i32 to vector<8x1xi32>
    %8 = arith.cmpi slt, %6, %7 : vector<8x1xi32>
    %9 = tpu.iota {dimensions = array<i32: 1>} : vector<8x16xi32>
    %10 = vector.broadcast %2 : vector<8x1xi32> to vector<8x16xi32>
    %11 = arith.cmpi eq, %9, %10 : vector<8x16xi32>
    %cst = arith.constant 0.000000e+00 : f32
    %12 = vector.shape_cast %1 : vector<1x16xf32> to vector<1x16xf32>
    %13 = vector.broadcast %12 : vector<1x16xf32> to vector<8x16xf32>
    %14 = vector.broadcast %cst : f32 to vector<8x16xf32>
    %15 = arith.select %11, %13, %14 : vector<8x16xi1>, vector<8x16xf32>
    %cst_6 = arith.constant dense<0.000000e+00> : vector<8xf32>
    %16 = vector.multi_reduction <add>, %15, %cst_6 [1] : vector<8x16xf32> to vector<8xf32>
    %17 = vector.shape_cast %16 : vector<8xf32> to vector<8x1xf32>
    %cst_7 = arith.constant 0.000000e+00 : f32
    %18 = vector.broadcast %cst_7 : f32 to vector<8x16xf32>
    %19 = arith.select %11, %0, %18 : vector<8x16xi1>, vector<8x16xf32>
    %cst_8 = arith.constant dense<0.000000e+00> : vector<8xf32>
    %20 = vector.multi_reduction <add>, %19, %cst_8 [1] : vector<8x16xf32> to vector<8xf32>
    %21 = vector.shape_cast %20 : vector<8xf32> to vector<8x1xf32>
    %22 = vector.broadcast %17 : vector<8x1xf32> to vector<8x16xf32>
    %23 = arith.subf %0, %22 : vector<8x16xf32>
    %24 = arith.select %11, %23, %0 : vector<8x16xi1>, vector<8x16xf32>
    %cst_9 = arith.constant 3.000000e+01 : f32
    %25 = vector.broadcast %cst_9 : f32 to vector<8x16xf32>
    %26 = arith.mulf %25, %24 : vector<8x16xf32>
    %cst_10 = arith.constant dense<0xFF800000> : vector<8xf32>
    %27 = vector.multi_reduction <maximumf>, %26, %cst_10 [1] : vector<8x16xf32> to vector<8xf32>
    %28 = vector.shape_cast %27 : vector<8xf32> to vector<8x1xf32>
    %29 = vector.broadcast %28 : vector<8x1xf32> to vector<8x16xf32>
    %30 = arith.subf %26, %29 : vector<8x16xf32>
    %31 = math.exp %30 : vector<8x16xf32>
    %cst_11 = arith.constant dense<0.000000e+00> : vector<8xf32>
    %32 = vector.multi_reduction <add>, %31, %cst_11 [1] : vector<8x16xf32> to vector<8xf32>
    %33 = vector.shape_cast %32 : vector<8xf32> to vector<8x1xf32>
    %34 = math.log %33 : vector<8x1xf32>
    %35 = arith.addf %34, %28 : vector<8x1xf32>
    %36 = arith.subf %21, %17 : vector<8x1xf32>
    %cst_12 = arith.constant 3.000000e+01 : f32
    %37 = vector.broadcast %cst_12 : f32 to vector<8x1xf32>
    %38 = arith.mulf %37, %36 : vector<8x1xf32>
    %39 = arith.subf %35, %38 : vector<8x1xf32>
    %cst_13 = arith.constant 0.000000e+00 : f32
    %40 = vector.broadcast %cst_13 : f32 to vector<8x1xf32>
    %41 = arith.select %8, %39, %40 : vector<8x1xi1>, vector<8x1xf32>
    %42 = vector.shape_cast %41 : vector<8x1xf32> to vector<1x8x1xf32>
    %cst_14 = arith.constant dense<0.000000e+00> : vector<1xf32>
    %43 = vector.multi_reduction <add>, %42, %cst_14 [1, 2] : vector<1x8x1xf32> to vector<1xf32>
    %44 = vector.shape_cast %43 : vector<1xf32> to vector<1x1x1xf32>
    %45 = vector.extract %44[0, 0, 0] : f32 from vector<1x1x1xf32>
    %46 = vector.broadcast %45 : f32 to vector<1x8x128xf32>
    %c0_15 = arith.constant 0 : index
    %c0_16 = arith.constant 0 : index
    %c0_17 = arith.constant 0 : index
    %47 = vector.load %arg4[%c0_15, %c0_16, %c0_17] : memref<1x8x128xf32, #tpu.memory_space<vmem>>, vector<1x8x128xf32>
    tpu.vector_store %arg4[%c0_15, %c0_16, %c0_17], %46 {strides = array<i32>} : memref<1x8x128xf32, #tpu.memory_space<vmem>>, vector<1x8x128xf32>,
    return
  }
  func.func @transform_0(%arg0: i32) -> (i32, i32) {
    %c0_i32 = arith.constant 0 : i32
    %c0_i32_0 = arith.constant 0 : i32
    return %arg0, %c0_i32 : i32, i32
  }
  func.func @transform_1(%arg0: i32) -> (i32, i32) {
    %c0_i32 = arith.constant 0 : i32
    %c0_i32_0 = arith.constant 0 : i32
    return %arg0, %c0_i32 : i32, i32
  }
  func.func @transform_2(%arg0: i32) -> (i32, i32) {
    %c0_i32 = arith.constant 0 : i32
    %c0_i32_0 = arith.constant 0 : i32
    %c0_i32_1 = arith.constant 0 : i32
    return %c0_i32, %c0_i32_0 : i32, i32
  }
  func.func @transform_3(%arg0: i32) -> (i32, i32, i32) {
    %c0_i32 = arith.constant 0 : i32
    %c0_i32_0 = arith.constant 0 : i32
    %c0_i32_1 = arith.constant 0 : i32
    return %arg0, %c0_i32, %c0_i32_0 : i32, i32, i32
  }
}

</mosaic_0001>

<llo_original>
// kernel: tpu_custom_call.1
$region0: #{tpu_custom_call.1}
  #allocation0 [shape = 'u32[]', space=smem, size = 0x4, offset = 0x4, fixed_abs, tag = 'smem constant byte address 0x4 - core index']
  #allocation1 [shape = 'u32[144,128]{1,0:T(1,128)}', space=vmem, size = 0x12000, scoped, tag = 'internal scratch']
  %s0 = inlined_call_operand.vmem [shape: s32[8,1], index: 0, kind: input, shape index: {}]
  %s1 = inlined_call_operand.vmem [shape: f32[8,16], index: 1, kind: input, shape index: {}]
  %s2 = inlined_call_operand.vmem [shape: f32[1,16], index: 2, kind: input, shape index: {}]
  %s3 = inlined_call_operand.hbm [shape: f32[1,8,128], index: 3, kind: output, shape index: {}]
  %s4 = sld [smem:[#allocation0]]
  $region22: #{tpu_custom_call.1} parent=0
    _
  %s6 = ssub.s32 1, %s4
  %s7 = scalar_select 0, %s6, %s4
  $region1: #{tpu_custom_call.1} parent=0
    #allocation2 [shape = 'u8[4096]{0}', space=vmem, size = 0x1000, scoped, tag = 'output window, operand 0, single buffered']
    #allocation3 [shape = 's32[1]{0}', space=sflag, size = 0x4, scoped, tag = 'scoped memory for tpu_custom_call.1']
    %8 = vsyncpa [#allocation3], 0
    // Predicated region
    $region2: #{tpu_custom_call.1} parent=1 // pred_check
      _
    $region3: #{tpu_custom_call.1} parent=1 // pred_check_branch
      %10 = sbr.rel (0) target = $region5
    $region4: #{tpu_custom_call.1} parent=1 // pred_region
      _
    $region5: #{tpu_custom_call.1} parent=1 // pred_fallthru
      _
    // Predicated region
    $region6: #{tpu_custom_call.1} parent=1 // pred_check
      _
    $region7: #{tpu_custom_call.1} parent=1 // pred_check_branch
      %12 = sbr.rel (0) target = $region9
    $region8: #{tpu_custom_call.1} parent=1 // pred_region
      _
    $region9: #{tpu_custom_call.1} parent=1 // pred_fallthru
      _
    // Predicated region
    $region10: #{tpu_custom_call.1} parent=1 // pred_check
      _
    $region11: #{tpu_custom_call.1} parent=1 // pred_check_branch
      %14 = sbr.rel (0) target = $region13
    $region12: #{tpu_custom_call.1} parent=1 // pred_region
      _
    $region13: #{tpu_custom_call.1} parent=1 // pred_fallthru
      _
    %v15 = vld [vmem:[%s1] sm:$0xff]
    %v16 = vld [vmem:[%s2] sm:$0x1]
    %v17 = vld [vmem:[%s0] sm:$0xff]
    %v18 = vlaneseq
    %v19 = vshrl.u32 %v18, 7
    %s20 = smul.u32 0, 8
    %v21 = vstv %s20
    %v22 = vadd.s32 %v21, %v19
    %vm23 = vcmp.lt.s32.totalorder %v22, 8
    %v24 = vlaneseq
    %v25 = vand.u32 %v24, 127
    %26 = vset.pattern.permute.xlu0 0
    %27 = vperm.xlu0 %26, %v17
    %v28 = vpop.permute.xlu0 %27
    %vm29 = vcmp.eq.s32.totalorder %v25, %v28
    %v31 = vlaneseq
    %v32 = vshrl.u32 %v31, 7
    %v33 = vsub.s32 0, %v32
    %v34 = vrot.slane %v16, %v33
    %v36 = vsel %vm29, %v34, 0.0
    %vm37 = vcmask 130048
    %v38 = vsel %vm37, %v36, 0.0
    %39 = vadd.xlane.f32.xlu0 %v38
    %v40 = vpop.xlane.xlu0 %39
    %v41 = vsel %vm29, %v15, 0.0
    %v42 = vsel %vm37, %v41, 0.0
    %43 = vadd.xlane.f32.xlu0 %v42
    %v44 = vpop.xlane.xlu0 %43
    %v45 = vsub.f32 %v15, %v40
    %v46 = vsel %vm29, %v45, %v15
    %v47 = vmul.f32 %v46, 30.0
    %v48 = vsel %vm37, %v47, -inf
    %49 = vmax.xlane.f32.xlu0 %v48
    %v50 = vpop.xlane.xlu0 %49
    %v51 = vsub.f32 %v47, %v50
    %v52 = vmul.f32 %v51, 1.442695
    %v53 = vpow.pop %v52
    %v54 = vsel %vm37, %v53, 0.0
    %55 = vadd.xlane.f32.xlu0 %v54
    %v56 = vpop.xlane.xlu0 %55
    %v57 = vlog2.pop %v56
    %v58 = vmul.f32 %v57, 0.6931472
    %v59 = vadd.f32 %v58, %v50
    %v60 = vsub.f32 %v44, %v40
    %v61 = vmul.f32 %v60, 30.0
    %v62 = vsub.f32 %v59, %v61
    %v63 = vsel %vm23, %v62, 0.0
    %vm64 = vcmask 7168
    %v65 = vsel %vm64, %v63, 0.0
    %66 = vadd.xlane.f32.xlu0 %v65
    %v67 = vpop.xlane.xlu0 %66
    %v68 = vrot.slane %v67, 4
    %v69 = vadd.f32 %v67, %v68
    %v70 = vrot.slane %v69, 2
    %v71 = vadd.f32 %v69, %v70
    %v72 = vrot.slane %v71, 1
    %v73 = vadd.f32 %v71, %v72
    %s74 = vtos %v73
    %v75 = vstv %s74
    %76 = vst [vmem:[#allocation2] sm:$0xff] %v75
    // Predicated region
    $region14: #{tpu_custom_call.1} parent=1 // pred_check
      _
    $region15: #{tpu_custom_call.1} parent=1 // pred_check_branch
      %78 = sbr.rel (0) target = $region17
    $region16: #{tpu_custom_call.1} parent=1 // pred_region
      %s80 = ssub.s32 128, 128
      %81 = vsyncadd [#allocation3], %s80
      %s83 = sshll.u32 [#allocation2], 4
      %s84 = int_to_ptr.vmem [resolvable:$true] %s83
      %86 = dma.vmem_to_hbm [thread:$0]  %s84, 128, %s3, [#allocation3]
    $region17: #{tpu_custom_call.1} parent=1 // pred_fallthru
      _
    // Predicated region
    $region18: #{tpu_custom_call.1} parent=1 // pred_check
      _
    $region19: #{tpu_custom_call.1} parent=1 // pred_check_branch
      %88 = sbr.rel (0) target = $region21
    $region20: #{tpu_custom_call.1} parent=1 // pred_region
      %89 = dma.done [#allocation3], 128
    $region21: #{tpu_custom_call.1} parent=1 // pred_fallthru
      _
    %90 = vsyncpa [#allocation3], 1

</llo_original>
